<compile_context>
chip_gen: v7x
topology: tpu7x:2x2x1
jax: 0.10.0
libtpu: 0.0.40
codegen_flags: <defaults>
</compile_context>

<pallas_src>
import functools

import jax
import jax.numpy as jnp
from jax.experimental import pallas as pl
from jax.experimental.pallas import tpu as pltpu

_LANES = 128
_SUBLANES = 8
_BODY_ALIGN = _SUBLANES * _LANES      # 1024: granularity handled by the kernel
_TARGET_BLOCK_BYTES = 1 << 20         # ~1 MiB / input buffer (tile-size knee);
                                      # 2 inputs x 2 bufs = 4 MiB pipelined ->
                                      # fits v5e 16 MiB scoped VMEM and v7x.
_SMALL_ITEM_BYTES = 1 << 20           # below this, stacking list items is cheap


def _round_down(x, m):
    return (x // m) * m


@functools.lru_cache(maxsize=1)
def _tensorcores_per_chip():
    """2 on v7x (megacore), 1 on v5e/v6e; conservative fallback of 1."""
    try:
        kind = jax.devices()[0].device_kind.lower()
    except Exception:
        return 1
    return 2 if ("v7" in kind or "7x" in kind) else 1


def _sq_sum_kernel(x_ref, t_ref, o_ref, *, block_rows, spc, rows, mask_possible):
    """Accumulate an (8,128) lane-dense partial of sum((x-t)^2) per (item,chunk)."""
    c = pl.program_id(1)   # chunk ("parallel"; feeds v7x megacore when used)
    s = pl.program_id(2)   # step within chunk ("arbitrary" / reduction)

    @pl.when(s == 0)
    def _():
        o_ref[...] = jnp.zeros_like(o_ref)

    # In-kernel upcast: inputs stream in native dtype, math in f32.
    d = x_ref[0].astype(jnp.float32) - t_ref[0].astype(jnp.float32)
    sq = d * d

    g = block_rows // _SUBLANES

    def fold(v):
        # (block_rows,128) -> (g,8,128) is tile-aligned (free); the axis-0 sum
        # lowers to plain vreg adds, keeping the hot loop VPU-only.
        return v.reshape(g, _SUBLANES, _LANES).sum(axis=0)[None, None]

    if mask_possible:
        row0 = (c * spc + s) * block_rows

        # Fast path: fully in-bounds block (the overwhelming majority).
        @pl.when(row0 + block_rows <= rows)
        def _():
            o_ref[...] += fold(sq)

        # Cold path: only the ragged boundary block / clamped duplicate block
        # pays the 2-D iota + compare + select.
        @pl.when(row0 + block_rows > rows)
        def _():
            rid = row0 + jax.lax.broadcasted_iota(
                jnp.int32, (block_rows, _LANES), 0)
            o_ref[...] += fold(jnp.where(rid < rows, sq, 0.0))
    else:
        o_ref[...] += fold(sq)


def _sum_sq_diff(p_slab, t_slab):
    """p_slab/t_slab: (n_items, rows, 128) with rows % 8 == 0, native dtypes.
    Returns (n_items,) f32 sums of squared differences."""
    n_items, rows, _ = p_slab.shape
    p_isize = jnp.dtype(p_slab.dtype).itemsize
    t_isize = jnp.dtype(t_slab.dtype).itemsize
    itemsize = max(p_isize, t_isize)

    # dtype-aware block: ~1 MiB per input buffer.
    max_rows = max(_SUBLANES,
                   _round_down(_TARGET_BLOCK_BYTES // (_LANES * itemsize),
                               _SUBLANES))
    block_rows = min(max_rows, rows)
    steps = pl.cdiv(rows, block_rows)

    # Chunk-split the reduction only when it buys megacore parallelism (v7x
    # with a single item); on single-TC chips it would only add a wasted
    # duplicate block of HBM traffic plus per-step masking.
    num_chunks = 2 if (_tensorcores_per_chip() >= 2 and n_items < 2
                       and steps >= 2) else 1
    spc = pl.cdiv(steps, num_chunks)
    mask_possible = (rows % block_rows != 0) or (spc * num_chunks != steps)

    kernel = functools.partial(_sq_sum_kernel, block_rows=block_rows, spc=spc,
                               rows=rows, mask_possible=mask_possible)

    def in_map(n, c, s):
        # Clamp any duplicated trailing block (when spc*num_chunks > steps) in
        # bounds; its contribution is zeroed by the in-kernel mask.
        return (n, jnp.minimum(c * spc + s, steps - 1), 0)

    out_bytes = n_items * num_chunks * _SUBLANES * _LANES * 4
    cost = pl.CostEstimate(
        flops=3 * n_items * rows * _LANES,
        transcendentals=0,
        bytes_accessed=n_items * rows * _LANES * (p_isize + t_isize) + out_bytes,
    )

    partials = pl.pallas_call(
        kernel,
        out_shape=jax.ShapeDtypeStruct(
            (n_items, num_chunks, _SUBLANES, _LANES), jnp.float32),
        grid_spec=pltpu.PrefetchScalarGridSpec(
            num_scalar_prefetch=0,
            grid=(n_items, num_chunks, spc),
            in_specs=[
                pl.BlockSpec((1, block_rows, _LANES), in_map),
                pl.BlockSpec((1, block_rows, _LANES), in_map),
            ],
            # Lane-dense (8,128) partial per (item, chunk): fully (8,128)
            # aligned (robust), acts as the accumulator across the reduction
            # axis, and defers the final cross-lane reduce to the wrapper.
            out_specs=pl.BlockSpec((1, 1, _SUBLANES, _LANES),
                                   lambda n, c, s: (n, c, 0, 0)),
        ),
        compiler_params=pltpu.CompilerParams(
            dimension_semantics=("parallel", "parallel", "arbitrary")),
        cost_estimate=cost,
    )(p_slab, t_slab)
    return jnp.sum(partials, axis=(1, 2, 3))


def _sum_sq_single(pred, target):
    """sum((pred-target)^2) in f32 for one pair; Pallas for the 1024-aligned
    body (reshape only -> copy-free when numel % 1024 == 0)."""
    p = jnp.asarray(pred).reshape(-1)
    t = jnp.asarray(target).reshape(-1)
    numel = p.shape[0]
    body = _round_down(numel, _BODY_ALIGN)
    total = jnp.float32(0.0)
    if body > 0:
        # TODO(synk): if XLA materializes this prefix slice (numel % 1024 != 0),
        # a fully copy-free path would need a 1-D ragged kernel layout.
        pb = p[:body].reshape(body // _LANES, _LANES)
        tb = t[:body].reshape(body // _LANES, _LANES)
        total = total + _sum_sq_diff(pb[None], tb[None])[0]
    if body < numel:
        # <1024-element lane-ragged tail: tiny jnp expression, no pad copy.
        d = p[body:].astype(jnp.float32) - t[body:].astype(jnp.float32)
        total = total + jnp.sum(d * d)
    return total


def _sum_sq_batched(preds, targets):
    """Equal-shaped SMALL items: stack (cheap at <=1 MiB/item) to amortize the
    launch + pipeline ramp over the whole list in a single pallas_call."""
    p = jnp.stack([jnp.asarray(x).reshape(-1) for x in preds])
    t = jnp.stack([jnp.asarray(x).reshape(-1) for x in targets])
    n, numel = p.shape
    body = _round_down(numel, _BODY_ALIGN)
    total = jnp.zeros((n,), jnp.float32)
    if body > 0:
        total = total + _sum_sq_diff(
            p[:, :body].reshape(n, body // _LANES, _LANES),
            t[:, :body].reshape(n, body // _LANES, _LANES))
    if body < numel:
        d = p[:, body:].astype(jnp.float32) - t[:, body:].astype(jnp.float32)
        total = total + jnp.sum(d * d, axis=1)
    return total


def base_loss_forward(preds, targets, weight=None):
    """JAX equivalent of BaseLoss.forward.

    TODO(synk): BaseLoss._forward is abstract in the PyTorch reference; the
    concrete per-item loss used here is weight * mean((pred - target)^2).
    """
    if isinstance(preds, (list, tuple)):
        preds = [jnp.asarray(x) for x in preds]
        targets = [jnp.asarray(x) for x in targets]
        n_items = len(preds)

        if weight is None:
            weights = jnp.ones((n_items,), jnp.float32)
        else:
            weights = jnp.asarray(weight, jnp.float32).reshape(-1)
            if weights.shape[0] == 1:
                weights = jnp.broadcast_to(weights, (n_items,))
            elif weights.shape[0] < n_items:
                raise ValueError(
                    f"weight has {weights.shape[0]} entries for {n_items} preds")
            else:
                weights = weights[:n_items]

        same = (
            all(p.shape == preds[0].shape and p.dtype == preds[0].dtype
                for p in preds)
            and all(t.shape == targets[0].shape and t.dtype == targets[0].dtype
                    for t in targets)
        )
        per_item_bytes = int(preds[0].size) * preds[0].dtype.itemsize
        if same and n_items > 1 and per_item_bytes <= _SMALL_ITEM_BYTES:
            sums = _sum_sq_batched(preds, targets)
        else:
            # Large (or heterogeneous) items: one launch per item — avoids the
            # jnp.stack read+write of every tensor on a bandwidth-bound op.
            sums = jnp.stack([_sum_sq_single(preds[n], targets[n])
                              for n in range(n_items)])
        numels = jnp.asarray([float(p.size) for p in preds], jnp.float32)
        errs = weights * sums / numels      # mean of empty tensor -> NaN (torch)
        return jnp.mean(errs)

    preds = jnp.asarray(preds)
    targets = jnp.asarray(targets)
    if weight is None:
        w = jnp.float32(1.0)
    else:
        w = jnp.asarray(weight, jnp.float32).reshape(-1)[0]
    total = _sum_sq_single(preds, targets)
    return w * total / jnp.float32(preds.size)


if __name__ == "__main__":
    key = jax.random.PRNGKey(0)
    k1, k2, k3, k4, k5, k6 = jax.random.split(key, 6)

    # Tensor case: NCHW [2, 4, 16, 16], default weight.
    pred = jax.random.normal(k1, (2, 4, 16, 16), jnp.float32)
    targ = jax.random.normal(k2, (2, 4, 16, 16), jnp.float32)
    err = base_loss_forward(pred, targ)

    # List case with explicit per-item weights (equal small shapes -> batched).
    pred2 = jax.random.normal(k3, (2, 4, 16, 16), jnp.float32)
    targ2 = jax.random.normal(k4, (2, 4, 16, 16), jnp.float32)
    w = jnp.array([0.5, 2.0], jnp.float32)
    err_list = base_loss_forward([pred, pred2], [targ, targ2], w)

    # bf16, lane-ragged numel (9*257 = 2313): kernel body + wrapper tail.
    pred3 = jax.random.normal(k5, (9, 257), jnp.float32).astype(jnp.bfloat16)
    targ3 = jax.random.normal(k6, (9, 257), jnp.float32).astype(jnp.bfloat16)
    err_bf16 = base_loss_forward(pred3, targ3)

    jax.block_until_ready((err, err_list, err_bf16))

    # Pure-JAX reference checks (f32 math).
    ref = jnp.mean((pred - targ) ** 2)
    ref_list = jnp.mean(jnp.stack([
        0.5 * jnp.mean((pred - targ) ** 2),
        2.0 * jnp.mean((pred2 - targ2) ** 2),
    ]))
    d3 = pred3.astype(jnp.float32) - targ3.astype(jnp.float32)
    ref_bf16 = jnp.mean(d3 * d3)

    assert jnp.allclose(err, ref, rtol=1e-5, atol=1e-6)
    assert jnp.allclose(err_list, ref_list, rtol=1e-5, atol=1e-6)
    assert jnp.allclose(err_bf16, ref_bf16, rtol=1e-5, atol=1e-6)

    print("KERNEL_OK")
</pallas_src>

<mosaic_0001>
module attributes {stable_mosaic.version = 11 : i64} {
  func.func @_sq_sum_kernel(%arg0: i32, %arg1: i32, %arg2: i32, %arg3: memref<1x16x128xf32, #tpu.memory_space<vmem>>, %arg4: memref<1x16x128xf32, #tpu.memory_space<vmem>>, %arg5: memref<1x1x8x128xf32, #tpu.memory_space<vmem>>) attributes {dimension_semantics = [#tpu.dimension_semantics<parallel>, #tpu.dimension_semantics<parallel>, #tpu.dimension_semantics<arbitrary>], iteration_bounds = array<i64: 1, 1, 1>, scalar_prefetch = 0 : i64, scratch_operands = 0 : i64, tpu.core_type = #tpu.core_type<tc>, window_params = [{transform_indices = @transform_0, window_bounds = array<i64: 1, 16, 128>}, {transform_indices = @transform_1, window_bounds = array<i64: 1, 16, 128>}, {transform_indices = @transform_2, window_bounds = array<i64: 1, 1, 8, 128>}]} {
    %c0_i32 = arith.constant 0 : i32
    %0 = arith.cmpi eq, %arg2, %c0_i32 : i32
    %1 = arith.extui %0 : i1 to i32
    %c0_i32_0 = arith.constant 0 : i32
    %2 = arith.cmpi ne, %1, %c0_i32_0 : i32
    scf.if %2 {
      %cst_14 = arith.constant 0.000000e+00 : f32
      %15 = vector.broadcast %cst_14 : f32 to vector<1x1x8x128xf32>
      %c0_15 = arith.constant 0 : index
      %c0_16 = arith.constant 0 : index
      %c0_17 = arith.constant 0 : index
      %c0_18 = arith.constant 0 : index
      %16 = vector.load %arg5[%c0_15, %c0_16, %c0_17, %c0_18] : memref<1x1x8x128xf32, #tpu.memory_space<vmem>>, vector<1x1x8x128xf32>
      tpu.vector_store %arg5[%c0_15, %c0_16, %c0_17, %c0_18], %15 {strides = array<i32>} : memref<1x1x8x128xf32, #tpu.memory_space<vmem>>, vector<1x1x8x128xf32>,
    } else {
    }
    %c0 = arith.constant 0 : index
    %c0_1 = arith.constant 0 : index
    %c0_2 = arith.constant 0 : index
    %3 = vector.load %arg3[%c0, %c0_1, %c0_2] : memref<1x16x128xf32, #tpu.memory_space<vmem>>, vector<1x16x128xf32>
    %4 = vector.shape_cast %3 : vector<1x16x128xf32> to vector<16x128xf32>
    %c0_3 = arith.constant 0 : index
    %c0_4 = arith.constant 0 : index
    %c0_5 = arith.constant 0 : index
    %5 = vector.load %arg4[%c0_3, %c0_4, %c0_5] : memref<1x16x128xf32, #tpu.memory_space<vmem>>, vector<1x16x128xf32>
    %6 = vector.shape_cast %5 : vector<1x16x128xf32> to vector<16x128xf32>
    %7 = arith.subf %4, %6 : vector<16x128xf32>
    %8 = arith.mulf %7, %7 : vector<16x128xf32>
    %c0_6 = arith.constant 0 : index
    %c0_7 = arith.constant 0 : index
    %c0_8 = arith.constant 0 : index
    %c0_9 = arith.constant 0 : index
    %9 = vector.load %arg5[%c0_6, %c0_7, %c0_8, %c0_9] : memref<1x1x8x128xf32, #tpu.memory_space<vmem>>, vector<1x1x8x128xf32>
    %10 = vector.shape_cast %8 : vector<16x128xf32> to vector<2x8x128xf32>
    %cst = arith.constant dense<0.000000e+00> : vector<8x128xf32>
    %11 = vector.multi_reduction <add>, %10, %cst [0] : vector<2x8x128xf32> to vector<8x128xf32>
    %12 = vector.shape_cast %11 : vector<8x128xf32> to vector<1x1x8x128xf32>
    %13 = arith.addf %9, %12 : vector<1x1x8x128xf32>
    %c0_10 = arith.constant 0 : index
    %c0_11 = arith.constant 0 : index
    %c0_12 = arith.constant 0 : index
    %c0_13 = arith.constant 0 : index
    %14 = vector.load %arg5[%c0_10, %c0_11, %c0_12, %c0_13] : memref<1x1x8x128xf32, #tpu.memory_space<vmem>>, vector<1x1x8x128xf32>
    tpu.vector_store %arg5[%c0_10, %c0_11, %c0_12, %c0_13], %13 {strides = array<i32>} : memref<1x1x8x128xf32, #tpu.memory_space<vmem>>, vector<1x1x8x128xf32>,
    return
  }
  func.func @transform_0(%arg0: i32, %arg1: i32, %arg2: i32) -> (i32, i32, i32) {
    %c1_i32 = arith.constant 1 : i32
    %0 = arith.muli %arg1, %c1_i32 : i32
    %1 = arith.addi %0, %arg2 : i32
    %c0_i32 = arith.constant 0 : i32
    %2 = arith.minsi %1, %c0_i32 : i32
    %c0_i32_0 = arith.constant 0 : i32
    %c0_i32_1 = arith.constant 0 : i32
    return %arg0, %2, %c0_i32_0 : i32, i32, i32
  }
  func.func @transform_1(%arg0: i32, %arg1: i32, %arg2: i32) -> (i32, i32, i32) {
    %c1_i32 = arith.constant 1 : i32
    %0 = arith.muli %arg1, %c1_i32 : i32
    %1 = arith.addi %0, %arg2 : i32
    %c0_i32 = arith.constant 0 : i32
    %2 = arith.minsi %1, %c0_i32 : i32
    %c0_i32_0 = arith.constant 0 : i32
    %c0_i32_1 = arith.constant 0 : i32
    return %arg0, %2, %c0_i32_0 : i32, i32, i32
  }
  func.func @transform_2(%arg0: i32, %arg1: i32, %arg2: i32) -> (i32, i32, i32, i32) {
    %c0_i32 = arith.constant 0 : i32
    %c0_i32_0 = arith.constant 0 : i32
    %c0_i32_1 = arith.constant 0 : i32
    return %arg0, %arg1, %c0_i32, %c0_i32_0 : i32, i32, i32, i32
  }
}

</mosaic_0001>

<llo_original>
// kernel: tpu_custom_call.1
$region0: #{tpu_custom_call.1}
  #allocation0 [shape = 'u32[]', space=smem, size = 0x4, offset = 0x4, fixed_abs, tag = 'smem constant byte address 0x4 - core index']
  #allocation1 [shape = 'u32[144,128]{1,0:T(1,128)}', space=vmem, size = 0x12000, scoped, tag = 'internal scratch']
  %s0 = inlined_call_operand.hbm [shape: f32[1,16,128], index: 0, kind: input, shape index: {}]
  %s1 = inlined_call_operand.hbm [shape: f32[1,16,128], index: 1, kind: input, shape index: {}]
  %s2 = inlined_call_operand.hbm [shape: f32[1,1,8,128], index: 2, kind: output, shape index: {}]
  %s3 = sld [smem:[#allocation0]]
  $region30: #{tpu_custom_call.1} parent=0
    _
  %s5 = ssub.s32 1, %s3
  %s6 = scalar_select 0, %s5, %s3
  $region1: #{tpu_custom_call.1} parent=0
    #allocation2 [shape = 'u8[8192]{0}', space=vmem, size = 0x2000, scoped, tag = 'input window, operand 0, single buffered']
    #allocation3 [shape = 's32[1]{0}', space=sflag, size = 0x4, scoped, tag = 'scoped memory for tpu_custom_call.1']
    #allocation4 [shape = 's32[1]{0}', space=sflag, size = 0x4, scoped, tag = 'scoped memory for tpu_custom_call.1']
    #allocation5 [shape = 'u8[8192]{0}', space=vmem, size = 0x2000, scoped, tag = 'input window, operand 1, single buffered']
    #allocation6 [shape = 's32[1]{0}', space=sflag, size = 0x4, scoped, tag = 'scoped memory for tpu_custom_call.1']
    #allocation7 [shape = 'u8[4096]{0}', space=vmem, size = 0x1000, scoped, tag = 'output window, operand 0, single buffered']
    %7 = vsyncpa [#allocation3], 0
    %8 = vsyncpa [#allocation6], 0
    %9 = vsyncpa [#allocation4], 0
    // Predicated region
    $region2: #{tpu_custom_call.1} parent=1 // pred_check
      _
    $region3: #{tpu_custom_call.1} parent=1 // pred_check_branch
      %11 = sbr.rel (0) target = $region5
    $region4: #{tpu_custom_call.1} parent=1 // pred_region
      %s12 = sadd.s32 0, 0
      %p13 = scmp.lt.s32.totalorder %s12, 0
      %s14 = scalar_select %p13, %s12, 0
      %s15 = smul.u32 2, %s14
      %s17 = ssub.s32 256, 256
      %18 = vsyncadd [#allocation3], %s17
      %s19 = smul.addr %s15, 128
      %s20 = scalar_lea.hbm %s0, %s19
      %s21 = sshll.u32 [#allocation2], 4
      %s22 = int_to_ptr.vmem [resolvable:$true] %s21
      %27 = dma.hbm_to_vmem [thread:$0]  %s20, 256, %s22, [#allocation3], 128, 128, 8
    $region5: #{tpu_custom_call.1} parent=1 // pred_fallthru
      _
    // Predicated region
    $region6: #{tpu_custom_call.1} parent=1 // pred_check
      _
    $region7: #{tpu_custom_call.1} parent=1 // pred_check_branch
      %29 = sbr.rel (0) target = $region9
    $region8: #{tpu_custom_call.1} parent=1 // pred_region
      %s30 = sadd.s32 0, 0
      %p31 = scmp.lt.s32.totalorder %s30, 0
      %s32 = scalar_select %p31, %s30, 0
      %s33 = smul.u32 2, %s32
      %s35 = ssub.s32 256, 256
      %36 = vsyncadd [#allocation6], %s35
      %s37 = smul.addr %s33, 128
      %s38 = scalar_lea.hbm %s1, %s37
      %s39 = sshll.u32 [#allocation5], 4
      %s40 = int_to_ptr.vmem [resolvable:$true] %s39
      %45 = dma.hbm_to_vmem [thread:$0]  %s38, 256, %s40, [#allocation6], 128, 128, 8
    $region9: #{tpu_custom_call.1} parent=1 // pred_fallthru
      _
    // Predicated region
    $region10: #{tpu_custom_call.1} parent=1 // pred_check
      _
    $region11: #{tpu_custom_call.1} parent=1 // pred_check_branch
      %47 = sbr.rel (0) target = $region13
    $region12: #{tpu_custom_call.1} parent=1 // pred_region
      %48 = dma.done [#allocation3], 256
    $region13: #{tpu_custom_call.1} parent=1 // pred_fallthru
      _
    // Predicated region
    $region14: #{tpu_custom_call.1} parent=1 // pred_check
      _
    $region15: #{tpu_custom_call.1} parent=1 // pred_check_branch
      %50 = sbr.rel (0) target = $region17
    $region16: #{tpu_custom_call.1} parent=1 // pred_region
      %51 = dma.done [#allocation6], 256
    $region17: #{tpu_custom_call.1} parent=1 // pred_fallthru
      _
    %s52 = sadd.s32 0, 0
    %p53 = scmp.lt.s32.totalorder %s52, 0
    %s54 = scalar_select %p53, %s52, 0
    %s55 = smul.u32 2, %s54
    %s56 = sadd.s32 0, 0
    %p57 = scmp.lt.s32.totalorder %s56, 0
    %s58 = scalar_select %p57, %s56, 0
    %s59 = smul.u32 2, %s58
    %p60 = scmp.eq.s32.totalorder 0, 0
    // Predicated region
    $region18: #{tpu_custom_call.1} parent=1 // pred_check
      %p61 = pneg %p60
    $region19: #{tpu_custom_call.1} parent=1 // pred_check_branch
      %63 = sbr.rel (%p61) target = $region21
    $region20: #{tpu_custom_call.1} parent=1 // pred_region
      %64 = vst [vmem:[#allocation7] sm:$0xff] 0.0
    $region21: #{tpu_custom_call.1} parent=1 // pred_fallthru
      _
    %v65 = vld [vmem:[#allocation2] sm:$0xff]
    %v66 = vld [vmem:[#allocation2 + $0x8] sm:$0xff]
    %v67 = vld [vmem:[#allocation5] sm:$0xff]
    %v68 = vld [vmem:[#allocation5 + $0x8] sm:$0xff]
    %v69 = vsub.f32 %v65, %v67
    %v70 = vsub.f32 %v66, %v68
    %v71 = vmul.f32 %v69, %v69
    %v72 = vmul.f32 %v70, %v70
    %v73 = vld [vmem:[#allocation7] sm:$0xff]
    %v74 = vadd.f32 %v71, %v72
    %v75 = vadd.f32 %v73, %v74
    %76 = vst [vmem:[#allocation7] sm:$0xff] %v75
    // Predicated region
    $region22: #{tpu_custom_call.1} parent=1 // pred_check
      _
    $region23: #{tpu_custom_call.1} parent=1 // pred_check_branch
      %78 = sbr.rel (0) target = $region25
    $region24: #{tpu_custom_call.1} parent=1 // pred_region
      %s80 = ssub.s32 128, 128
      %81 = vsyncadd [#allocation4], %s80
      %s83 = sshll.u32 [#allocation7], 4
      %s84 = int_to_ptr.vmem [resolvable:$true] %s83
      %86 = dma.vmem_to_hbm [thread:$0]  %s84, 128, %s2, [#allocation4]
    $region25: #{tpu_custom_call.1} parent=1 // pred_fallthru
      _
    // Predicated region
    $region26: #{tpu_custom_call.1} parent=1 // pred_check
      _
    $region27: #{tpu_custom_call.1} parent=1 // pred_check_branch
      %88 = sbr.rel (0) target = $region29
    $region28: #{tpu_custom_call.1} parent=1 // pred_region
      %89 = dma.done [#allocation4], 128
    $region29: #{tpu_custom_call.1} parent=1 // pred_fallthru
      _
    %90 = vsyncpa [#allocation3], 1
    %91 = vsyncpa [#allocation6], 1
    %92 = vsyncpa [#allocation4], 1

</llo_original>
